<compile_context>
chip_gen: v5e
topology: v5e:2x2
jax: 0.10.0
libtpu: 0.0.40
codegen_flags: <defaults>
</compile_context>

<pallas_src>
import functools

import jax
import jax.numpy as jnp
from jax.experimental import pallas as pl
from jax.experimental.pallas import tpu as pltpu


def packing_nchw(x, r=2):
    """Space-to-depth, identical to the PyTorch `packing` helper (NCHW)."""
    b, c, h, w = x.shape
    oh, ow = h // r, w // r
    x = x.reshape(b, c, oh, r, ow, r)
    x = jnp.transpose(x, (0, 1, 3, 5, 2, 4))
    return x.reshape(b, c * r * r, oh, ow)


def _pack_conv_kernel(x_ref, w_ref, b_ref, o_ref, *, K, pad, OH, OW, Cin, bb):
    """One batch block (bb elements) per grid step.

    x_ref : (bb, OH, OW, Cin)        bf16 packed input (NHWC, UNpadded)
    w_ref : (Cout, K*K*Cin)          bf16 conv weights with BN scale folded in
    b_ref : (Cout, 1)                f32 folded BN bias
    o_ref : (1, Cout, bb*OH*OW)      bf16 output, spatial (lane-dense) last
    """
    x = x_ref[...]                                       # bf16, no converts

    # Zero halo built in-kernel (value-level concat) -> no wrapper jnp.pad.
    if pad > 0:
        zh = jnp.zeros((bb, pad, OW, Cin), x.dtype)
        x = jnp.concatenate([zh, x, zh], axis=1)          # (bb, OH+2p, OW, Cin)
        zw = jnp.zeros((bb, OH + 2 * pad, pad, Cin), x.dtype)
        x = jnp.concatenate([zw, x, zw], axis=2)          # (bb, HP, WP, Cin)

    # im2col as a bf16 value: K*K shifted windows side by side on the lane axis.
    # Column order (kh*K + kw)*Cin + cin matches the folded weight layout.
    patches = []
    for kh in range(K):
        for kw in range(K):
            p = x[:, kh:kh + OH, kw:kw + OW, :]           # (bb, OH, OW, Cin)
            patches.append(p.reshape(bb * OH * OW, Cin))  # rows = b*OH*OW + i*OW + j
    col = jnp.concatenate(patches, axis=-1)               # (bb*OH*OW, K*K*Cin) bf16

    # Single MXU matmul, deep contraction, spatial on the lane axis:
    #   (Cout, K*K*Cin) . (bb*OH*OW, K*K*Cin)^T -> (Cout, bb*OH*OW), f32 acc.
    acc = jax.lax.dot_general(
        w_ref[...], col,
        dimension_numbers=(((1,), (1,)), ((), ())),
        preferred_element_type=jnp.float32)

    y = jnp.maximum(acc + b_ref[...], 0.0)                # f32 bias + ReLU
    o_ref[0] = y.astype(o_ref.dtype)                      # bf16 writeback, 128+ lanes


def pack_layer_conv2d(x_nchw, weight_oikk, gamma, beta, running_mean, running_var,
                      *, r=2, eps=1e-5):
    """PackLayerConv2d forward. x_nchw: [B, C, H, W] -> [B, C, H/r, W/r]."""
    B, C, H, W = x_nchw.shape
    Cout, Cin, K, _ = weight_oikk.shape
    assert Cin == C * r * r and Cout == C
    pad = K // 2  # dilation = 1
    OH, OW = H // r, W // r

    # Batch elements per grid step: makes the output last dim (bb*OH*OW) lane
    # dense (>=128) at small spatial sizes.
    bb = 2 if B % 2 == 0 else 1
    NB = B // bb
    Nlane = bb * OH * OW

    # --- glue (bf16): ONE fused pack + NHWC transpose; no jnp.pad (halo is
    #     built in-kernel).  Packed channel = c*r*r + ri*r + rj (PyTorch order).
    xb = x_nchw.astype(jnp.bfloat16)
    x_nhwc = xb.reshape(B, C, OH, r, OW, r).transpose(0, 2, 4, 1, 3, 5)
    x_nhwc = x_nhwc.reshape(B, OH, OW, Cin)

    # --- fold eval-mode BatchNorm into conv weights (f32 fold, then bf16 cast).
    scale = (gamma.astype(jnp.float32) /
             jnp.sqrt(running_var.astype(jnp.float32) + eps))              # (Cout,)
    bias = beta.astype(jnp.float32) - running_mean.astype(jnp.float32) * scale
    # OIHW -> (Cout, K, K, Cin) -> (Cout, K*K*Cin); column order matches im2col.
    w_flat = jnp.transpose(weight_oikk, (0, 2, 3, 1)).reshape(Cout, K * K * Cin)
    w_flat = (w_flat.astype(jnp.float32) * scale[:, None]).astype(jnp.bfloat16)
    bias2d = bias.reshape(Cout, 1)

    kernel = functools.partial(_pack_conv_kernel, K=K, pad=pad, OH=OH, OW=OW,
                               Cin=Cin, bb=bb)

    out_flat = pl.pallas_call(
        kernel,
        out_shape=jax.ShapeDtypeStruct((NB, Cout, Nlane), jnp.bfloat16),
        grid_spec=pltpu.PrefetchScalarGridSpec(
            num_scalar_prefetch=0,
            grid=(NB,),
            in_specs=[
                pl.BlockSpec((bb, OH, OW, Cin), lambda b: (b, 0, 0, 0)),
                pl.BlockSpec((Cout, K * K * Cin), lambda b: (0, 0)),
                pl.BlockSpec((Cout, 1), lambda b: (0, 0)),
            ],
            out_specs=pl.BlockSpec((1, Cout, Nlane), lambda b: (b, 0, 0)),
        ),
        # Default scoped-VMEM limit is ample (usage here is a few KiB); do NOT
        # request 64 MiB -- that is the entire physical VMEM on v7x.
        compiler_params=pltpu.CompilerParams(
            dimension_semantics=("parallel",)),
    )(x_nhwc, w_flat, bias2d)

    # (NB, Cout, bb*OH*OW) -> (B, Cout, OH, OW).  Tiny bf16 output; the
    # transpose and the f32 upcast fuse into one pass.
    out = out_flat.reshape(NB, Cout, bb, OH, OW).transpose(0, 2, 1, 3, 4)
    out = out.reshape(B, Cout, OH, OW)
    return out.astype(jnp.float32)


def _reference(x_nchw, weight_oikk, gamma, beta, running_mean, running_var,
               *, r=2, eps=1e-5):
    """Pure-JAX f32 reference (for correctness check)."""
    K = weight_oikk.shape[-1]
    pad = K // 2
    xp = packing_nchw(x_nchw, r=r)
    y = jax.lax.conv_general_dilated(
        xp, weight_oikk, window_strides=(1, 1),
        padding=((pad, pad), (pad, pad)),
        dimension_numbers=("NCHW", "OIHW", "NCHW"))
    scale = gamma / jnp.sqrt(running_var + eps)
    bias = beta - running_mean * scale
    y = y * scale[None, :, None, None] + bias[None, :, None, None]
    return jnp.maximum(y, 0.0)


if __name__ == "__main__":
    # Small shapes: B=2, C=4, H=W=16, r=2, kernel_size=3
    B, C, H, W = 2, 4, 16, 16
    r, K = 2, 3
    Cin, Cout = C * r * r, C

    key = jax.random.PRNGKey(0)
    k_x, k_w, k_g, k_b, k_m, k_v = jax.random.split(key, 6)

    x = jax.random.normal(k_x, (B, C, H, W), dtype=jnp.float32)
    # Conv2d weight (PyTorch OIHW layout), bias=False
    weight = 0.1 * jax.random.normal(k_w, (Cout, Cin, K, K), dtype=jnp.float32)
    # BatchNorm2d params / running stats (eval-mode semantics)
    gamma = 1.0 + 0.1 * jax.random.normal(k_g, (Cout,), dtype=jnp.float32)
    beta = 0.1 * jax.random.normal(k_b, (Cout,), dtype=jnp.float32)
    running_mean = 0.1 * jax.random.normal(k_m, (Cout,), dtype=jnp.float32)
    running_var = jnp.abs(1.0 + 0.1 * jax.random.normal(k_v, (Cout,), dtype=jnp.float32))

    out = pack_layer_conv2d(x, weight, gamma, beta, running_mean, running_var, r=r)
    out = jax.block_until_ready(out)

    ref = _reference(x, weight, gamma, beta, running_mean, running_var, r=r)
    assert out.shape == (B, C, H // r, W // r), out.shape
    # Intentional precision contract: bf16 MXU operands + bf16 output writeback
    # -> relaxed tolerance vs the f32 reference.
    assert jnp.allclose(out, ref, atol=5e-2, rtol=5e-2), \
        float(jnp.max(jnp.abs(out - ref)))

    print("KERNEL_OK")
</pallas_src>

<mosaic_0001>
module attributes {stable_mosaic.version = 11 : i64} {
  func.func @_pack_conv_kernel(%arg0: i32, %arg1: memref<2x8x8x16xbf16, #tpu.memory_space<vmem>>, %arg2: memref<4x144xbf16, #tpu.memory_space<vmem>>, %arg3: memref<4x1xf32, #tpu.memory_space<vmem>>, %arg4: memref<1x4x128xbf16, #tpu.memory_space<vmem>>) attributes {dimension_semantics = [#tpu.dimension_semantics<parallel>], iteration_bounds = array<i64: 1>, scalar_prefetch = 0 : i64, scratch_operands = 0 : i64, tpu.core_type = #tpu.core_type<tc>, window_params = [{transform_indices = @transform_0, window_bounds = array<i64: 2, 8, 8, 16>}, {pipeline_mode = #tpu.pipeline_mode<synchronous>, transform_indices = @transform_1, window_bounds = array<i64: 4, 144>}, {pipeline_mode = #tpu.pipeline_mode<synchronous>, transform_indices = @transform_2, window_bounds = array<i64: 4, 1>}, {transform_indices = @transform_3, window_bounds = array<i64: 1, 4, 128>}]} {
    %c0 = arith.constant 0 : index
    %c0_0 = arith.constant 0 : index
    %c0_1 = arith.constant 0 : index
    %c0_2 = arith.constant 0 : index
    %0 = vector.load %arg1[%c0, %c0_0, %c0_1, %c0_2] : memref<2x8x8x16xbf16, #tpu.memory_space<vmem>>, vector<2x8x8x16xbf16>
    %cst = arith.constant 0.000000e+00 : bf16
    %1 = vector.broadcast %cst : bf16 to vector<2x1x8x16xbf16>
    %2 = tpu.concatenate %1, %0, %1 in 1 : vector<2x1x8x16xbf16>, vector<2x8x8x16xbf16>, vector<2x1x8x16xbf16> -> vector<2x10x8x16xbf16>
    %cst_3 = arith.constant 0.000000e+00 : bf16
    %3 = vector.broadcast %cst_3 : bf16 to vector<2x10x1x16xbf16>
    %4 = tpu.concatenate %3, %2, %3 in 2 : vector<2x10x1x16xbf16>, vector<2x10x8x16xbf16>, vector<2x10x1x16xbf16> -> vector<2x10x10x16xbf16>
    %5 = vector.extract_strided_slice %4 {offsets = [0, 0, 0, 0], sizes = [2, 8, 8, 16], strides = [1, 1, 1, 1]} : vector<2x10x10x16xbf16> to vector<2x8x8x16xbf16>
    %6 = vector.shape_cast %5 : vector<2x8x8x16xbf16> to vector<128x16xbf16>
    %7 = vector.extract_strided_slice %4 {offsets = [0, 0, 1, 0], sizes = [2, 8, 8, 16], strides = [1, 1, 1, 1]} : vector<2x10x10x16xbf16> to vector<2x8x8x16xbf16>
    %8 = vector.shape_cast %7 : vector<2x8x8x16xbf16> to vector<128x16xbf16>
    %9 = vector.extract_strided_slice %4 {offsets = [0, 0, 2, 0], sizes = [2, 8, 8, 16], strides = [1, 1, 1, 1]} : vector<2x10x10x16xbf16> to vector<2x8x8x16xbf16>
    %10 = vector.shape_cast %9 : vector<2x8x8x16xbf16> to vector<128x16xbf16>
    %11 = vector.extract_strided_slice %4 {offsets = [0, 1, 0, 0], sizes = [2, 8, 8, 16], strides = [1, 1, 1, 1]} : vector<2x10x10x16xbf16> to vector<2x8x8x16xbf16>
    %12 = vector.shape_cast %11 : vector<2x8x8x16xbf16> to vector<128x16xbf16>
    %13 = vector.extract_strided_slice %4 {offsets = [0, 1, 1, 0], sizes = [2, 8, 8, 16], strides = [1, 1, 1, 1]} : vector<2x10x10x16xbf16> to vector<2x8x8x16xbf16>
    %14 = vector.shape_cast %13 : vector<2x8x8x16xbf16> to vector<128x16xbf16>
    %15 = vector.extract_strided_slice %4 {offsets = [0, 1, 2, 0], sizes = [2, 8, 8, 16], strides = [1, 1, 1, 1]} : vector<2x10x10x16xbf16> to vector<2x8x8x16xbf16>
    %16 = vector.shape_cast %15 : vector<2x8x8x16xbf16> to vector<128x16xbf16>
    %17 = vector.extract_strided_slice %4 {offsets = [0, 2, 0, 0], sizes = [2, 8, 8, 16], strides = [1, 1, 1, 1]} : vector<2x10x10x16xbf16> to vector<2x8x8x16xbf16>
    %18 = vector.shape_cast %17 : vector<2x8x8x16xbf16> to vector<128x16xbf16>
    %19 = vector.extract_strided_slice %4 {offsets = [0, 2, 1, 0], sizes = [2, 8, 8, 16], strides = [1, 1, 1, 1]} : vector<2x10x10x16xbf16> to vector<2x8x8x16xbf16>
    %20 = vector.shape_cast %19 : vector<2x8x8x16xbf16> to vector<128x16xbf16>
    %21 = vector.extract_strided_slice %4 {offsets = [0, 2, 2, 0], sizes = [2, 8, 8, 16], strides = [1, 1, 1, 1]} : vector<2x10x10x16xbf16> to vector<2x8x8x16xbf16>
    %22 = vector.shape_cast %21 : vector<2x8x8x16xbf16> to vector<128x16xbf16>
    %23 = tpu.concatenate %6, %8, %10, %12, %14, %16, %18, %20, %22 in 1 : vector<128x16xbf16>, vector<128x16xbf16>, vector<128x16xbf16>, vector<128x16xbf16>, vector<128x16xbf16>, vector<128x16xbf16>, vector<128x16xbf16>, vector<128x16xbf16>, vector<128x16xbf16> -> vector<128x144xbf16>
    %c0_4 = arith.constant 0 : index
    %c0_5 = arith.constant 0 : index
    %24 = vector.load %arg2[%c0_4, %c0_5] : memref<4x144xbf16, #tpu.memory_space<vmem>>, vector<4x144xbf16>
    %cst_6 = arith.constant dense<0.000000e+00> : vector<4x128xf32>
    %25 = tpu.matmul %24, %23, %cst_6 {dimension_numbers = #tpu.dot_dimension_numbers<[1], [1], [0], [0], [0, 0, 1, 0], [], []>} : vector<4x144xbf16>, vector<128x144xbf16>, vector<4x128xf32> -> vector<4x128xf32>
    %c0_7 = arith.constant 0 : index
    %c0_8 = arith.constant 0 : index
    %26 = vector.load %arg3[%c0_7, %c0_8] : memref<4x1xf32, #tpu.memory_space<vmem>>, vector<4x1xf32>
    %27 = vector.broadcast %26 : vector<4x1xf32> to vector<4x128xf32>
    %28 = arith.addf %25, %27 : vector<4x128xf32>
    %cst_9 = arith.constant 0.000000e+00 : f32
    %29 = vector.broadcast %cst_9 : f32 to vector<4x128xf32>
    %30 = arith.maximumf %28, %29 : vector<4x128xf32>
    %31 = arith.truncf %30 : vector<4x128xf32> to vector<4x128xbf16>
    %c0_10 = arith.constant 0 : index
    %c0_11 = arith.constant 0 : index
    %c0_12 = arith.constant 0 : index
    %32 = vector.load %arg4[%c0_10, %c0_11, %c0_12] : memref<1x4x128xbf16, #tpu.memory_space<vmem>>, vector<1x4x128xbf16>
    %33 = vector.shape_cast %32 : vector<1x4x128xbf16> to vector<4x128xbf16>
    %34 = vector.shape_cast %31 : vector<4x128xbf16> to vector<1x4x128xbf16>
    tpu.vector_store %arg4[%c0_10, %c0_11, %c0_12], %34 {strides = array<i32>} : memref<1x4x128xbf16, #tpu.memory_space<vmem>>, vector<1x4x128xbf16>,
    return
  }
  func.func @transform_0(%arg0: i32) -> (i32, i32, i32, i32) {
    %c0_i32 = arith.constant 0 : i32
    %c0_i32_0 = arith.constant 0 : i32
    %c0_i32_1 = arith.constant 0 : i32
    %c0_i32_2 = arith.constant 0 : i32
    return %arg0, %c0_i32, %c0_i32_0, %c0_i32_1 : i32, i32, i32, i32
  }
  func.func @transform_1(%arg0: i32) -> (i32, i32) {
    %c0_i32 = arith.constant 0 : i32
    %c0_i32_0 = arith.constant 0 : i32
    %c0_i32_1 = arith.constant 0 : i32
    return %c0_i32, %c0_i32_0 : i32, i32
  }
  func.func @transform_2(%arg0: i32) -> (i32, i32) {
    %c0_i32 = arith.constant 0 : i32
    %c0_i32_0 = arith.constant 0 : i32
    %c0_i32_1 = arith.constant 0 : i32
    return %c0_i32, %c0_i32_0 : i32, i32
  }
  func.func @transform_3(%arg0: i32) -> (i32, i32, i32) {
    %c0_i32 = arith.constant 0 : i32
    %c0_i32_0 = arith.constant 0 : i32
    %c0_i32_1 = arith.constant 0 : i32
    return %arg0, %c0_i32, %c0_i32_0 : i32, i32, i32
  }
}

</mosaic_0001>

<llo_original>
// kernel: tpu_custom_call.1
$region0: #{tpu_custom_call.1}
  #allocation0 [shape = 'u32[]', space=smem, size = 0x4, offset = 0x4, fixed_abs, tag = 'smem constant byte address 0x4 - core index']
  #allocation1 [shape = 'u32[72,128]{1,0:T(1,128)}', space=vmem, size = 0x9000, scoped, tag = 'internal scratch']
  %s0 = inlined_call_operand.hbm [shape: bf16[2,8,8,16], index: 0, kind: input, shape index: {}]
  %s1 = inlined_call_operand.vmem [shape: bf16[4,144], index: 1, kind: input, shape index: {}]
  %s2 = inlined_call_operand.vmem [shape: f32[4,1], index: 2, kind: input, shape index: {}]
  %s3 = inlined_call_operand.hbm [shape: bf16[1,4,128], index: 3, kind: output, shape index: {}]
  %s4 = sld [smem:[#allocation0]]
  $region26: #{tpu_custom_call.1} parent=0
    _
  %s6 = ssub.s32 1, %s4
  %s7 = scalar_select 0, %s6, %s4
  $region1: #{tpu_custom_call.1} parent=0
    #allocation2 [shape = 'u8[32768]{0}', space=vmem, size = 0x8000, scoped, tag = 'input window, operand 0, single buffered']
    #allocation3 [shape = 's32[1]{0}', space=sflag, size = 0x4, scoped, tag = 'scoped memory for tpu_custom_call.1']
    #allocation4 [shape = 's32[1]{0}', space=sflag, size = 0x4, scoped, tag = 'scoped memory for tpu_custom_call.1']
    #allocation5 [shape = 'u8[1024]{0}', space=vmem, size = 0x400, scoped, tag = 'output window, operand 0, single buffered']
    %8 = vsyncpa [#allocation3], 0
    %9 = vsyncpa [#allocation4], 0
    // Predicated region
    $region2: #{tpu_custom_call.1} parent=1 // pred_check
      _
    $region3: #{tpu_custom_call.1} parent=1 // pred_check_branch
      %11 = sbr.rel (0) target = $region5
    $region4: #{tpu_custom_call.1} parent=1 // pred_region
      %13 = vsyncadd [#allocation3], 0
      %s14 = sshll.u32 %s0, 4
      %s15 = int_to_ptr.hbm [resolvable:$true] %s14
      %s16 = sshll.u32 [#allocation2], 4
      %s17 = int_to_ptr.vmem [resolvable:$true] %s16
      %22 = dma.hbm_to_vmem [thread:$0]  %s15, 1024, %s17, [#allocation3], 64, 64, 4
    $region5: #{tpu_custom_call.1} parent=1 // pred_fallthru
      _
    // Predicated region
    $region6: #{tpu_custom_call.1} parent=1 // pred_check
      _
    $region7: #{tpu_custom_call.1} parent=1 // pred_check_branch
      %24 = sbr.rel (0) target = $region9
    $region8: #{tpu_custom_call.1} parent=1 // pred_region
      _
    $region9: #{tpu_custom_call.1} parent=1 // pred_fallthru
      _
    // Predicated region
    $region10: #{tpu_custom_call.1} parent=1 // pred_check
      _
    $region11: #{tpu_custom_call.1} parent=1 // pred_check_branch
      %26 = sbr.rel (0) target = $region13
    $region12: #{tpu_custom_call.1} parent=1 // pred_region
      _
    $region13: #{tpu_custom_call.1} parent=1 // pred_fallthru
      _
    // Predicated region
    $region14: #{tpu_custom_call.1} parent=1 // pred_check
      _
    $region15: #{tpu_custom_call.1} parent=1 // pred_check_branch
      %28 = sbr.rel (0) target = $region17
    $region16: #{tpu_custom_call.1} parent=1 // pred_region
      %30 = dma.done [#allocation3], 1024
    $region17: #{tpu_custom_call.1} parent=1 // pred_fallthru
      _
    %v32 = vld [vmem:[#allocation2] sm:$0xf]
    %v33 = vld [vmem:[#allocation2 + $0x4] sm:$0xf]
    %v34 = vld [vmem:[#allocation2 + $0x8] sm:$0xf]
    %v35 = vld [vmem:[#allocation2 + $0xc] sm:$0xf]
    %v36 = vld [vmem:[#allocation2 + $0x10] sm:$0xf]
    %v37 = vld [vmem:[#allocation2 + $0x14] sm:$0xf]
    %v38 = vld [vmem:[#allocation2 + $0x18] sm:$0xf]
    %v39 = vld [vmem:[#allocation2 + $0x1c] sm:$0xf]
    %v40 = vld [vmem:[#allocation2 + $0x20] sm:$0xf]
    %v41 = vld [vmem:[#allocation2 + $0x24] sm:$0xf]
    %v42 = vld [vmem:[#allocation2 + $0x28] sm:$0xf]
    %v43 = vld [vmem:[#allocation2 + $0x2c] sm:$0xf]
    %v44 = vld [vmem:[#allocation2 + $0x30] sm:$0xf]
    %v45 = vld [vmem:[#allocation2 + $0x34] sm:$0xf]
    %v46 = vld [vmem:[#allocation2 + $0x38] sm:$0xf]
    %v47 = vld [vmem:[#allocation2 + $0x3c] sm:$0xf]
    %v49 = vshrl.u32 0, 16
    %v51 = vrot.slane %v49, 7
    %v52 = vshll.u32 0, 16
    %v54 = vor.u32 %v51, %v52
    %v56 = vshrl.u32 %v32, 16
    %v58 = vrot.slane %v56, 7
    %v59 = vshll.u32 %v32, 16
    %v61 = vor.u32 %v58, %v59
    %v63 = vshrl.u32 %v33, 16
    %v65 = vrot.slane %v63, 7
    %v66 = vshll.u32 %v33, 16
    %v68 = vor.u32 %v65, %v66
    %v70 = vshrl.u32 %v34, 16
    %v72 = vrot.slane %v70, 7
    %v73 = vshll.u32 %v34, 16
    %v75 = vor.u32 %v72, %v73
    %v77 = vshrl.u32 %v35, 16
    %v79 = vrot.slane %v77, 7
    %v80 = vshll.u32 %v35, 16
    %v82 = vor.u32 %v79, %v80
    %v84 = vshrl.u32 %v36, 16
    %v86 = vrot.slane %v84, 7
    %v87 = vshll.u32 %v36, 16
    %v89 = vor.u32 %v86, %v87
    %v91 = vshrl.u32 %v37, 16
    %v93 = vrot.slane %v91, 7
    %v94 = vshll.u32 %v37, 16
    %v96 = vor.u32 %v93, %v94
    %v98 = vshrl.u32 %v38, 16
    %v100 = vrot.slane %v98, 7
    %v101 = vshll.u32 %v38, 16
    %v103 = vor.u32 %v100, %v101
    %v105 = vshrl.u32 %v39, 16
    %v107 = vrot.slane %v105, 7
    %v108 = vshll.u32 %v39, 16
    %v110 = vor.u32 %v107, %v108
    %v112 = vshrl.u32 %v40, 16
    %v114 = vrot.slane %v112, 7
    %v115 = vshll.u32 %v40, 16
    %v117 = vor.u32 %v114, %v115
    %v119 = vshrl.u32 %v41, 16
    %v121 = vrot.slane %v119, 7
    %v122 = vshll.u32 %v41, 16
    %v124 = vor.u32 %v121, %v122
    %v126 = vshrl.u32 %v42, 16
    %v128 = vrot.slane %v126, 7
    %v129 = vshll.u32 %v42, 16
    %v131 = vor.u32 %v128, %v129
    %v133 = vshrl.u32 %v43, 16
    %v135 = vrot.slane %v133, 7
    %v136 = vshll.u32 %v43, 16
    %v138 = vor.u32 %v135, %v136
    %v140 = vshrl.u32 %v44, 16
    %v142 = vrot.slane %v140, 7
    %v143 = vshll.u32 %v44, 16
    %v145 = vor.u32 %v142, %v143
    %v147 = vshrl.u32 %v45, 16
    %v149 = vrot.slane %v147, 7
    %v150 = vshll.u32 %v45, 16
    %v152 = vor.u32 %v149, %v150
    %v154 = vshrl.u32 %v46, 16
    %v156 = vrot.slane %v154, 7
    %v157 = vshll.u32 %v46, 16
    %v159 = vor.u32 %v156, %v157
    %v161 = vshrl.u32 %v47, 16
    %v163 = vrot.slane %v161, 7
    %v164 = vshll.u32 %v47, 16
    %v166 = vor.u32 %v163, %v164
    %vm184 = vcmask 1040384
    %vm185 = vsmask.f32 256
    %vm186 = vmand %vm184, %vm185
    %v187 = vsel %vm186, 0, %v54
    %v188 = vsel %vm186, 0, %v61
    %v189 = vsel %vm186, 0, %v68
    %v190 = vsel %vm186, 0, %v75
    %v191 = vsel %vm186, 0, %v82
    %v192 = vsel %vm186, 0, %v89
    %v193 = vsel %vm186, 0, %v96
    %v194 = vsel %vm186, 0, %v103
    %v195 = vsel %vm186, 0, %v110
    %v196 = vsel %vm186, 0, %v117
    %v197 = vsel %vm186, 0, %v124
    %v198 = vsel %vm186, 0, %v131
    %v199 = vsel %vm186, 0, %v138
    %v200 = vsel %vm186, 0, %v145
    %v201 = vsel %vm186, 0, %v152
    %v202 = vsel %vm186, 0, %v159
    %v203 = vsel %vm186, 0, %v166
    %vm204 = vcmask 1044480
    %vm205 = vsmask.f32 4352
    %vm206 = vmand %vm204, %vm205
    %v207 = vsel %vm206, %v187, 0
    %v208 = vsel %vm206, %v188, 0
    %v209 = vsel %vm206, %v189, 0
    %v210 = vsel %vm206, %v190, 0
    %v211 = vsel %vm206, %v191, 0
    %v212 = vsel %vm206, %v192, 0
    %v213 = vsel %vm206, %v193, 0
    %v214 = vsel %vm206, %v194, 0
    %v215 = vsel %vm206, %v195, 0
    %v216 = vsel %vm206, %v196, 0
    %v217 = vsel %vm206, %v197, 0
    %v218 = vsel %vm206, %v198, 0
    %v219 = vsel %vm206, %v199, 0
    %v220 = vsel %vm206, %v200, 0
    %v221 = vsel %vm206, %v201, 0
    %v222 = vsel %vm206, %v202, 0
    %v223 = vsel %vm206, %v203, 0
    %v239 = vunpack.c.l.b16 %v207
    %v240 = vunpack.c.h.b16 %v207
    %v241 = vunpack.c.l.b16 %v208
    %v242 = vunpack.c.h.b16 %v208
    %v243 = vunpack.c.l.b16 %v209
    %v244 = vunpack.c.h.b16 %v209
    %v245 = vunpack.c.l.b16 %v210
    %v246 = vunpack.c.h.b16 %v210
    %v247 = vunpack.c.l.b16 %v211
    %v248 = vunpack.c.h.b16 %v211
    %v249 = vunpack.c.l.b16 %v212
    %v250 = vunpack.c.h.b16 %v212
    %v251 = vunpack.c.l.b16 %v213
    %v252 = vunpack.c.h.b16 %v213
    %v253 = vunpack.c.l.b16 %v214
    %v254 = vunpack.c.h.b16 %v214
    %v255 = vunpack.c.l.b16 %v216
    %v256 = vunpack.c.h.b16 %v216
    %v257 = vunpack.c.l.b16 %v217
    %v258 = vunpack.c.h.b16 %v217
    %v259 = vunpack.c.l.b16 %v218
    %v260 = vunpack.c.h.b16 %v218
    %v261 = vunpack.c.l.b16 %v219
    %v262 = vunpack.c.h.b16 %v219
    %v263 = vunpack.c.l.b16 %v220
    %v264 = vunpack.c.h.b16 %v220
    %v265 = vunpack.c.l.b16 %v221
    %v266 = vunpack.c.h.b16 %v221
    %v267 = vunpack.c.l.b16 %v222
    %v268 = vunpack.c.h.b16 %v222
    %v269 = vpack.c.b16 %v239, %v239
    %v270 = vpack.c.b16 %v240, %v240
    %v271 = vpack.c.b16 %v241, %v241
    %v272 = vpack.c.b16 %v242, %v242
    %v273 = vpack.c.b16 %v243, %v243
    %v274 = vpack.c.b16 %v244, %v244
    %v275 = vpack.c.b16 %v245, %v245
    %v276 = vpack.c.b16 %v246, %v246
    %v277 = vpack.c.b16 %v247, %v247
    %v278 = vpack.c.b16 %v248, %v248
    %v279 = vpack.c.b16 %v249, %v249
    %v280 = vpack.c.b16 %v250, %v250
    %v281 = vpack.c.b16 %v251, %v251
    %v282 = vpack.c.b16 %v252, %v252
    %v283 = vpack.c.b16 %v253, %v253
    %v284 = vpack.c.b16 %v254, %v254
    %v285 = vpack.c.b16 %v255, %v255
    %v286 = vpack.c.b16 %v256, %v256
    %v287 = vpack.c.b16 %v257, %v257
    %v288 = vpack.c.b16 %v258, %v258
    %v289 = vpack.c.b16 %v259, %v259
    %v290 = vpack.c.b16 %v260, %v260
    %v291 = vpack.c.b16 %v261, %v261
    %v292 = vpack.c.b16 %v262, %v262
    %v293 = vpack.c.b16 %v263, %v263
    %v294 = vpack.c.b16 %v264, %v264
    %v295 = vpack.c.b16 %v265, %v265
    %v296 = vpack.c.b16 %v266, %v266
    %v297 = vpack.c.b16 %v267, %v267
    %v298 = vpack.c.b16 %v268, %v268
    %vm299 = vsmask.f32 3328
    %vm300 = vsmask.f32 7440
    %vm301 = vmor %vm299, %vm300
    %v303 = vshrl.u32 %v269, 16
    %v305 = vrot.slane %v303, 4
    %v306 = vshll.u32 %v269, 16
    %v308 = vrot.slane %v306, 5
    %v309 = vor.u32 %v305, %v308
    %v310 = vrot.slane %v309, 4
    %v312 = vshll.u32 %v270, 16
    %v314 = vrot.slane %v312, 5
    %v315 = vsel %vm301, %v310, %v314
    %v317 = vshrl.u32 %v271, 16
    %v319 = vrot.slane %v317, 4
    %v320 = vshll.u32 %v271, 16
    %v322 = vrot.slane %v320, 5
    %v323 = vor.u32 %v319, %v322
    %v324 = vrot.slane %v323, 4
    %v326 = vshll.u32 %v272, 16
    %v328 = vrot.slane %v326, 5
    %v329 = vsel %vm301, %v324, %v328
    %v331 = vshrl.u32 %v273, 16
    %v333 = vrot.slane %v331, 4
    %v334 = vshll.u32 %v273, 16
    %v336 = vrot.slane %v334, 5
    %v337 = vor.u32 %v333, %v336
    %v338 = vrot.slane %v337, 4
    %v340 = vshll.u32 %v274, 16
    %v342 = vrot.slane %v340, 5
    %v343 = vsel %vm301, %v338, %v342
    %v345 = vshrl.u32 %v275, 16
    %v347 = vrot.slane %v345, 4
    %v348 = vshll.u32 %v275, 16
    %v350 = vrot.slane %v348, 5
    %v351 = vor.u32 %v347, %v350
    %v352 = vrot.slane %v351, 4
    %v354 = vshll.u32 %v276, 16
    %v356 = vrot.slane %v354, 5
    %v357 = vsel %vm301, %v352, %v356
    %v359 = vshrl.u32 %v277, 16
    %v361 = vrot.slane %v359, 4
    %v362 = vshll.u32 %v277, 16
    %v364 = vrot.slane %v362, 5
    %v365 = vor.u32 %v361, %v364
    %v366 = vrot.slane %v365, 4
    %v368 = vshll.u32 %v278, 16
    %v370 = vrot.slane %v368, 5
    %v371 = vsel %vm301, %v366, %v370
    %v373 = vshrl.u32 %v279, 16
    %v375 = vrot.slane %v373, 4
    %v376 = vshll.u32 %v279, 16
    %v378 = vrot.slane %v376, 5
    %v379 = vor.u32 %v375, %v378
    %v380 = vrot.slane %v379, 4
    %v382 = vshll.u32 %v280, 16
    %v384 = vrot.slane %v382, 5
    %v385 = vsel %vm301, %v380, %v384
    %v387 = vshrl.u32 %v281, 16
    %v389 = vrot.slane %v387, 4
    %v390 = vshll.u32 %v281, 16
    %v392 = vrot.slane %v390, 5
    %v393 = vor.u32 %v389, %v392
    %v394 = vrot.slane %v393, 4
    %v396 = vshll.u32 %v282, 16
    %v398 = vrot.slane %v396, 5
    %v399 = vsel %vm301, %v394, %v398
    %v401 = vshrl.u32 %v283, 16
    %v403 = vrot.slane %v401, 4
    %v404 = vshll.u32 %v283, 16
    %v406 = vrot.slane %v404, 5
    %v407 = vor.u32 %v403, %v406
    %v408 = vrot.slane %v407, 4
    %v410 = vshll.u32 %v284, 16
    %v412 = vrot.slane %v410, 5
    %v413 = vsel %vm301, %v408, %v412
    %v415 = vshrl.u32 %v285, 16
    %v417 = vrot.slane %v415, 4
    %v418 = vshll.u32 %v285, 16
    %v420 = vrot.slane %v418, 5
    %v421 = vor.u32 %v417, %v420
    %v422 = vrot.slane %v421, 4
    %v424 = vshll.u32 %v286, 16
    %v426 = vrot.slane %v424, 5
    %v427 = vsel %vm301, %v422, %v426
    %v429 = vshrl.u32 %v287, 16
    %v431 = vrot.slane %v429, 4
    %v432 = vshll.u32 %v287, 16
    %v434 = vrot.slane %v432, 5
    %v435 = vor.u32 %v431, %v434
    %v436 = vrot.slane %v435, 4
    %v438 = vshll.u32 %v288, 16
    %v440 = vrot.slane %v438, 5
    %v441 = vsel %vm301, %v436, %v440
    %v443 = vshrl.u32 %v289, 16
    %v445 = vrot.slane %v443, 4
    %v446 = vshll.u32 %v289, 16
    %v448 = vrot.slane %v446, 5
    %v449 = vor.u32 %v445, %v448
    %v450 = vrot.slane %v449, 4
    %v452 = vshll.u32 %v290, 16
    %v454 = vrot.slane %v452, 5
    %v455 = vsel %vm301, %v450, %v454
    %v457 = vshrl.u32 %v291, 16
    %v459 = vrot.slane %v457, 4
    %v460 = vshll.u32 %v291, 16
    %v462 = vrot.slane %v460, 5
    %v463 = vor.u32 %v459, %v462
    %v464 = vrot.slane %v463, 4
    %v466 = vshll.u32 %v292, 16
    %v468 = vrot.slane %v466, 5
    %v469 = vsel %vm301, %v464, %v468
    %v471 = vshrl.u32 %v293, 16
    %v473 = vrot.slane %v471, 4
    %v474 = vshll.u32 %v293, 16
    %v476 = vrot.slane %v474, 5
    %v477 = vor.u32 %v473, %v476
    %v478 = vrot.slane %v477, 4
    %v480 = vshll.u32 %v294, 16
    %v482 = vrot.slane %v480, 5
    %v483 = vsel %vm301, %v478, %v482
    %v485 = vshrl.u32 %v295, 16
    %v487 = vrot.slane %v485, 4
    %v488 = vshll.u32 %v295, 16
    %v490 = vrot.slane %v488, 5
    %v491 = vor.u32 %v487, %v490
    %v492 = vrot.slane %v491, 4
    %v494 = vshll.u32 %v296, 16
    %v496 = vrot.slane %v494, 5
    %v497 = vsel %vm301, %v492, %v496
    %v499 = vshrl.u32 %v297, 16
    %v501 = vrot.slane %v499, 4
    %v502 = vshll.u32 %v297, 16
    %v504 = vrot.slane %v502, 5
    %v505 = vor.u32 %v501, %v504
    %v506 = vrot.slane %v505, 4
    %v508 = vshll.u32 %v298, 16
    %v510 = vrot.slane %v508, 5
    %v511 = vsel %vm301, %v506, %v510
    %vm512 = vcmask 1042432
    %vm513 = vcmask 1046532
    %vm514 = vmor %vm512, %vm513
    %v515 = vrot.slane %v269, 5
    %v516 = vrot.slane %v515, 4
    %v517 = vrot.slane %v270, 5
    %v518 = vsel %vm514, %v516, %v517
    %v519 = vrot.slane %v271, 5
    %v520 = vrot.slane %v519, 4
    %v521 = vrot.slane %v272, 5
    %v522 = vsel %vm514, %v520, %v521
    %v523 = vrot.slane %v273, 5
    %v524 = vrot.slane %v523, 4
    %v525 = vrot.slane %v274, 5
    %v526 = vsel %vm514, %v524, %v525
    %v527 = vrot.slane %v275, 5
    %v528 = vrot.slane %v527, 4
    %v529 = vrot.slane %v276, 5
    %v530 = vsel %vm514, %v528, %v529
    %v531 = vrot.slane %v277, 5
    %v532 = vrot.slane %v531, 4
    %v533 = vrot.slane %v278, 5
    %v534 = vsel %vm514, %v532, %v533
    %v535 = vrot.slane %v279, 5
    %v536 = vrot.slane %v535, 4
    %v537 = vrot.slane %v280, 5
    %v538 = vsel %vm514, %v536, %v537
    %v539 = vrot.slane %v281, 5
    %v540 = vrot.slane %v539, 4
    %v541 = vrot.slane %v282, 5
    %v542 = vsel %vm514, %v540, %v541
    %v543 = vrot.slane %v283, 5
    %v544 = vrot.slane %v543, 4
    %v545 = vrot.slane %v284, 5
    %v546 = vsel %vm514, %v544, %v545
    %v547 = vrot.slane %v285, 5
    %v548 = vrot.slane %v547, 4
    %v549 = vrot.slane %v286, 5
    %v550 = vsel %vm514, %v548, %v549
    %v551 = vrot.slane %v287, 5
    %v552 = vrot.slane %v551, 4
    %v553 = vrot.slane %v288, 5
    %v554 = vsel %vm514, %v552, %v553
    %v555 = vrot.slane %v289, 5
    %v556 = vrot.slane %v555, 4
    %v557 = vrot.slane %v290, 5
    %v558 = vsel %vm514, %v556, %v557
    %v559 = vrot.slane %v291, 5
    %v560 = vrot.slane %v559, 4
    %v561 = vrot.slane %v292, 5
    %v562 = vsel %vm514, %v560, %v561
    %v563 = vrot.slane %v293, 5
    %v564 = vrot.slane %v563, 4
    %v565 = vrot.slane %v294, 5
    %v566 = vsel %vm514, %v564, %v565
    %v567 = vrot.slane %v295, 5
    %v568 = vrot.slane %v567, 4
    %v569 = vrot.slane %v296, 5
    %v570 = vsel %vm514, %v568, %v569
    %v571 = vrot.slane %v297, 5
    %v572 = vrot.slane %v571, 4
    %v573 = vrot.slane %v298, 5
    %v574 = vsel %vm514, %v572, %v573
    %v577 = vunpack.c.l.b16 %v215
    %v578 = vunpack.c.h.b16 %v215
    %v579 = vunpack.c.l.b16 %v223
    %v580 = vunpack.c.h.b16 %v223
    %v581 = vpack.c.b16 %v577, %v577
    %v582 = vpack.c.b16 %v578, %v578
    %v583 = vpack.c.b16 %v579, %v579
    %v584 = vpack.c.b16 %v580, %v580
    %v586 = vshrl.u32 %v581, 16
    %v588 = vrot.slane %v586, 4
    %v589 = vshll.u32 %v581, 16
    %v591 = vrot.slane %v589, 5
    %v592 = vor.u32 %v588, %v591
    %v593 = vrot.slane %v592, 4
    %v595 = vshll.u32 %v582, 16
    %v597 = vrot.slane %v595, 5
    %v598 = vsel %vm301, %v593, %v597
    %v600 = vshrl.u32 %v583, 16
    %v602 = vrot.slane %v600, 4
    %v603 = vshll.u32 %v583, 16
    %v605 = vrot.slane %v603, 5
    %v606 = vor.u32 %v602, %v605
    %v607 = vrot.slane %v606, 4
    %v609 = vshll.u32 %v584, 16
    %v611 = vrot.slane %v609, 5
    %v612 = vsel %vm301, %v607, %v611
    %v613 = vrot.slane %v581, 5
    %v614 = vrot.slane %v613, 4
    %v615 = vrot.slane %v582, 5
    %v616 = vsel %vm514, %v614, %v615
    %v617 = vrot.slane %v583, 5
    %v618 = vrot.slane %v617, 4
    %v619 = vrot.slane %v584, 5
    %v620 = vsel %vm514, %v618, %v619
    %v621 = vpack.c.b16 %v241, %v239
    %v622 = vpack.c.b16 %v245, %v243
    %v623 = vpack.c.b16 %v249, %v247
    %v624 = vpack.c.b16 %v253, %v251
    %v625 = vpack.c.b16 %v255, %v239
    %v626 = vpack.c.b16 %v259, %v257
    %v627 = vpack.c.b16 %v263, %v261
    %v628 = vpack.c.b16 %v267, %v265
    %v629 = vunpack.c.l.b16 %v315
    %v630 = vunpack.c.l.b16 %v329
    %v631 = vunpack.c.l.b16 %v343
    %v632 = vunpack.c.l.b16 %v357
    %v633 = vunpack.c.l.b16 %v371
    %v634 = vunpack.c.l.b16 %v385
    %v635 = vunpack.c.l.b16 %v399
    %v636 = vunpack.c.l.b16 %v413
    %v637 = vunpack.c.l.b16 %v427
    %v638 = vunpack.c.l.b16 %v441
    %v639 = vunpack.c.l.b16 %v455
    %v640 = vunpack.c.l.b16 %v469
    %v641 = vunpack.c.l.b16 %v483
    %v642 = vunpack.c.l.b16 %v497
    %v643 = vunpack.c.l.b16 %v511
    %v644 = vpack.c.b16 %v630, %v629
    %v645 = vpack.c.b16 %v632, %v631
    %v646 = vpack.c.b16 %v634, %v633
    %v647 = vpack.c.b16 %v636, %v635
    %v648 = vpack.c.b16 %v637, %v629
    %v649 = vpack.c.b16 %v639, %v638
    %v650 = vpack.c.b16 %v641, %v640
    %v651 = vpack.c.b16 %v643, %v642
    %652 = vrot.lane.b32.xlu0 %v644, 16
    %v653 = vpop.permute.xlu0 %652
    %654 = vrot.lane.b32.xlu0 %v645, 16
    %v655 = vpop.permute.xlu0 %654
    %656 = vrot.lane.b32.xlu0 %v646, 16
    %v657 = vpop.permute.xlu0 %656
    %658 = vrot.lane.b32.xlu0 %v647, 16
    %v659 = vpop.permute.xlu0 %658
    %660 = vrot.lane.b32.xlu0 %v648, 16
    %v661 = vpop.permute.xlu0 %660
    %662 = vrot.lane.b32.xlu0 %v649, 16
    %v663 = vpop.permute.xlu0 %662
    %664 = vrot.lane.b32.xlu0 %v650, 16
    %v665 = vpop.permute.xlu0 %664
    %666 = vrot.lane.b32.xlu0 %v651, 16
    %v667 = vpop.permute.xlu0 %666
    %v668 = vunpack.c.l.b16 %v518
    %v669 = vunpack.c.l.b16 %v522
    %v670 = vunpack.c.l.b16 %v526
    %v671 = vunpack.c.l.b16 %v530
    %v672 = vunpack.c.l.b16 %v534
    %v673 = vunpack.c.l.b16 %v538
    %v674 = vunpack.c.l.b16 %v542
    %v675 = vunpack.c.l.b16 %v546
    %v676 = vunpack.c.l.b16 %v550
    %v677 = vunpack.c.l.b16 %v554
    %v678 = vunpack.c.l.b16 %v558
    %v679 = vunpack.c.l.b16 %v562
    %v680 = vunpack.c.l.b16 %v566
    %v681 = vunpack.c.l.b16 %v570
    %v682 = vunpack.c.l.b16 %v574
    %v683 = vpack.c.b16 %v669, %v668
    %v684 = vpack.c.b16 %v671, %v670
    %v685 = vpack.c.b16 %v673, %v672
    %v686 = vpack.c.b16 %v675, %v674
    %v687 = vpack.c.b16 %v676, %v668
    %v688 = vpack.c.b16 %v678, %v677
    %v689 = vpack.c.b16 %v680, %v679
    %v690 = vpack.c.b16 %v682, %v681
    %691 = vrot.lane.b32.xlu0 %v683, 32
    %v692 = vpop.permute.xlu0 %691
    %693 = vrot.lane.b32.xlu0 %v684, 32
    %v694 = vpop.permute.xlu0 %693
    %695 = vrot.lane.b32.xlu0 %v685, 32
    %v696 = vpop.permute.xlu0 %695
    %697 = vrot.lane.b32.xlu0 %v686, 32
    %v698 = vpop.permute.xlu0 %697
    %699 = vrot.lane.b32.xlu0 %v687, 32
    %v700 = vpop.permute.xlu0 %699
    %701 = vrot.lane.b32.xlu0 %v688, 32
    %v702 = vpop.permute.xlu0 %701
    %703 = vrot.lane.b32.xlu0 %v689, 32
    %v704 = vpop.permute.xlu0 %703
    %705 = vrot.lane.b32.xlu0 %v690, 32
    %v706 = vpop.permute.xlu0 %705
    %v707 = vpack.c.b16 %v243, %v241
    %v708 = vpack.c.b16 %v247, %v245
    %v709 = vpack.c.b16 %v251, %v249
    %v710 = vpack.c.b16 %v577, %v253
    %v711 = vpack.c.b16 %v257, %v255
    %v712 = vpack.c.b16 %v261, %v259
    %v713 = vpack.c.b16 %v265, %v263
    %v714 = vpack.c.b16 %v579, %v267
    %715 = vrot.lane.b32.xlu0 %v707, 48
    %v716 = vpop.permute.xlu0 %715
    %717 = vrot.lane.b32.xlu0 %v708, 48
    %v718 = vpop.permute.xlu0 %717
    %719 = vrot.lane.b32.xlu0 %v709, 48
    %v720 = vpop.permute.xlu0 %719
    %721 = vrot.lane.b32.xlu0 %v710, 48
    %v722 = vpop.permute.xlu0 %721
    %723 = vrot.lane.b32.xlu0 %v711, 48
    %v724 = vpop.permute.xlu0 %723
    %725 = vrot.lane.b32.xlu0 %v712, 48
    %v726 = vpop.permute.xlu0 %725
    %727 = vrot.lane.b32.xlu0 %v713, 48
    %v728 = vpop.permute.xlu0 %727
    %729 = vrot.lane.b32.xlu0 %v714, 48
    %v730 = vpop.permute.xlu0 %729
    %v731 = vunpack.c.l.b16 %v598
    %v732 = vunpack.c.l.b16 %v612
    %v733 = vpack.c.b16 %v631, %v630
    %v734 = vpack.c.b16 %v633, %v632
    %v735 = vpack.c.b16 %v635, %v634
    %v736 = vpack.c.b16 %v731, %v636
    %v737 = vpack.c.b16 %v638, %v637
    %v738 = vpack.c.b16 %v640, %v639
    %v739 = vpack.c.b16 %v642, %v641
    %v740 = vpack.c.b16 %v732, %v643
    %741 = vrot.lane.b32.xlu0 %v733, 64
    %v742 = vpop.permute.xlu0 %741
    %743 = vrot.lane.b32.xlu0 %v734, 64
    %v744 = vpop.permute.xlu0 %743
    %745 = vrot.lane.b32.xlu0 %v735, 64
    %v746 = vpop.permute.xlu0 %745
    %747 = vrot.lane.b32.xlu0 %v736, 64
    %v748 = vpop.permute.xlu0 %747
    %749 = vrot.lane.b32.xlu0 %v737, 64
    %v750 = vpop.permute.xlu0 %749
    %751 = vrot.lane.b32.xlu0 %v738, 64
    %v752 = vpop.permute.xlu0 %751
    %753 = vrot.lane.b32.xlu0 %v739, 64
    %v754 = vpop.permute.xlu0 %753
    %755 = vrot.lane.b32.xlu0 %v740, 64
    %v756 = vpop.permute.xlu0 %755
    %v757 = vunpack.c.l.b16 %v616
    %v758 = vunpack.c.l.b16 %v620
    %v759 = vpack.c.b16 %v670, %v669
    %v760 = vpack.c.b16 %v672, %v671
    %v761 = vpack.c.b16 %v674, %v673
    %v762 = vpack.c.b16 %v757, %v675
    %v763 = vpack.c.b16 %v677, %v676
    %v764 = vpack.c.b16 %v679, %v678
    %v765 = vpack.c.b16 %v681, %v680
    %v766 = vpack.c.b16 %v758, %v682
    %767 = vrot.lane.b32.xlu0 %v759, 80
    %v768 = vpop.permute.xlu0 %767
    %769 = vrot.lane.b32.xlu0 %v760, 80
    %v770 = vpop.permute.xlu0 %769
    %771 = vrot.lane.b32.xlu0 %v761, 80
    %v772 = vpop.permute.xlu0 %771
    %773 = vrot.lane.b32.xlu0 %v762, 80
    %v774 = vpop.permute.xlu0 %773
    %775 = vrot.lane.b32.xlu0 %v763, 80
    %v776 = vpop.permute.xlu0 %775
    %777 = vrot.lane.b32.xlu0 %v764, 80
    %v778 = vpop.permute.xlu0 %777
    %779 = vrot.lane.b32.xlu0 %v765, 80
    %v780 = vpop.permute.xlu0 %779
    %781 = vrot.lane.b32.xlu0 %v766, 80
    %v782 = vpop.permute.xlu0 %781
    %v783 = vpack.c.b16 %v239, %v577
    %v784 = vpack.c.b16 %v239, %v579
    %785 = vrot.lane.b32.xlu0 %v622, 96
    %v786 = vpop.permute.xlu0 %785
    %787 = vrot.lane.b32.xlu0 %v623, 96
    %v788 = vpop.permute.xlu0 %787
    %789 = vrot.lane.b32.xlu0 %v624, 96
    %v790 = vpop.permute.xlu0 %789
    %791 = vrot.lane.b32.xlu0 %v783, 96
    %v792 = vpop.permute.xlu0 %791
    %793 = vrot.lane.b32.xlu0 %v626, 96
    %v794 = vpop.permute.xlu0 %793
    %795 = vrot.lane.b32.xlu0 %v627, 96
    %v796 = vpop.permute.xlu0 %795
    %797 = vrot.lane.b32.xlu0 %v628, 96
    %v798 = vpop.permute.xlu0 %797
    %799 = vrot.lane.b32.xlu0 %v784, 96
    %v800 = vpop.permute.xlu0 %799
    %v801 = vpack.c.b16 %v629, %v731
    %v802 = vpack.c.b16 %v629, %v732
    %803 = vrot.lane.b32.xlu0 %v645, 112
    %v804 = vpop.permute.xlu0 %803
    %805 = vrot.lane.b32.xlu0 %v646, 112
    %v806 = vpop.permute.xlu0 %805
    %807 = vrot.lane.b32.xlu0 %v647, 112
    %v808 = vpop.permute.xlu0 %807
    %809 = vrot.lane.b32.xlu0 %v801, 112
    %v810 = vpop.permute.xlu0 %809
    %811 = vrot.lane.b32.xlu0 %v649, 112
    %v812 = vpop.permute.xlu0 %811
    %813 = vrot.lane.b32.xlu0 %v650, 112
    %v814 = vpop.permute.xlu0 %813
    %815 = vrot.lane.b32.xlu0 %v651, 112
    %v816 = vpop.permute.xlu0 %815
    %817 = vrot.lane.b32.xlu0 %v802, 112
    %v818 = vpop.permute.xlu0 %817
    %v819 = vpack.c.b16 %v668, %v757
    %v820 = vpack.c.b16 %v668, %v758
    %vm821 = vcmask 130048
    %v824 = vsel %vm821, %v621, %v653
    %v827 = vsel %vm821, %v622, %v655
    %v830 = vsel %vm821, %v623, %v657
    %v833 = vsel %vm821, %v624, %v659
    %v836 = vsel %vm821, %v625, %v661
    %v839 = vsel %vm821, %v626, %v663
    %v842 = vsel %vm821, %v627, %v665
    %v845 = vsel %vm821, %v628, %v667
    %vm846 = vcmask 261120
    %v848 = vsel %vm846, %v824, %v692
    %v850 = vsel %vm846, %v827, %v694
    %v852 = vsel %vm846, %v830, %v696
    %v854 = vsel %vm846, %v833, %v698
    %v856 = vsel %vm846, %v836, %v700
    %v858 = vsel %vm846, %v839, %v702
    %v860 = vsel %vm846, %v842, %v704
    %v862 = vsel %vm846, %v845, %v706
    %vm863 = vcmask 392192
    %v865 = vsel %vm863, %v848, %v716
    %v867 = vsel %vm863, %v850, %v718
    %v869 = vsel %vm863, %v852, %v720
    %v871 = vsel %vm863, %v854, %v722
    %v873 = vsel %vm863, %v856, %v724
    %v875 = vsel %vm863, %v858, %v726
    %v877 = vsel %vm863, %v860, %v728
    %v879 = vsel %vm863, %v862, %v730
    %vm880 = vcmask 523264
    %v882 = vsel %vm880, %v865, %v742
    %v884 = vsel %vm880, %v867, %v744
    %v886 = vsel %vm880, %v869, %v746
    %v888 = vsel %vm880, %v871, %v748
    %v890 = vsel %vm880, %v873, %v750
    %v892 = vsel %vm880, %v875, %v752
    %v894 = vsel %vm880, %v877, %v754
    %v896 = vsel %vm880, %v879, %v756
    %vm897 = vcmask 654336
    %v899 = vsel %vm897, %v882, %v768
    %v901 = vsel %vm897, %v884, %v770
    %v903 = vsel %vm897, %v886, %v772
    %v905 = vsel %vm897, %v888, %v774
    %v907 = vsel %vm897, %v890, %v776
    %v909 = vsel %vm897, %v892, %v778
    %v911 = vsel %vm897, %v894, %v780
    %v913 = vsel %vm897, %v896, %v782
    %vm914 = vcmask 785408
    %v916 = vsel %vm914, %v899, %v786
    %v918 = vsel %vm914, %v901, %v788
    %v920 = vsel %vm914, %v903, %v790
    %v922 = vsel %vm914, %v905, %v792
    %v924 = vsel %vm914, %v907, %v794
    %v926 = vsel %vm914, %v909, %v796
    %v928 = vsel %vm914, %v911, %v798
    %v930 = vsel %vm914, %v913, %v800
    %vm931 = vcmask 916480
    %v933 = vsel %vm931, %v916, %v804
    %v936 = vsel %vm931, %v918, %v806
    %v939 = vsel %vm931, %v920, %v808
    %v942 = vsel %vm931, %v922, %v810
    %v945 = vsel %vm931, %v924, %v812
    %v948 = vsel %vm931, %v926, %v814
    %v951 = vsel %vm931, %v928, %v816
    %v954 = vsel %vm931, %v930, %v818
    %v956 = vld [vmem:[%s1] sm:$0xf]
    %v957 = vld [vmem:[%s2] sm:$0xf]
    %959 = vset.pattern.permute.xlu0 0
    %960 = vperm.xlu0 %959, %v957
    %v961 = vpop.permute.xlu0 %960
    %964 = vst [vmem:[#allocation1] ss:$4 sm:$0xff] %v956
    %v965 = vld.sshfl [vmem:[#allocation1] sm:$0xff pattern:$0x73625140]
    %v966 = vld.sshfl [vmem:[#allocation1 + $0x8] sm:$0xff pattern:$0x73625140]
    %v968 = vsel %vm821, %v966, 0
    %v971 = vsel %vm821, %v684, 0
    %v974 = vsel %vm821, %v685, 0
    %v977 = vsel %vm821, %v686, 0
    %v980 = vsel %vm821, %v819, 0
    %v983 = vsel %vm821, %v688, 0
    %v986 = vsel %vm821, %v689, 0
    %v989 = vsel %vm821, %v690, 0
    %v992 = vsel %vm821, %v820, 0
    %994 = vmatpush.bf16.xpose.msra.mxu0 %v954
    %995 = vmatpush.bf16.xpose.msra.mxu0 %v951
    %996 = vmatpush.bf16.xpose.msra.mxu0 %v948
    %997 = vmatpush.bf16.xpose.msra.mxu0 %v945
    %998 = vmatpush.bf16.xpose.msra.mxu0 %v942
    %999 = vmatpush.bf16.xpose.msra.mxu0 %v939
    %1000 = vmatpush.bf16.xpose.msra.mxu0 %v936
    %1001 = vmatpush.bf16.xpose.msra.mxu0 %v933
    %1002 = vmatmul.bf16.gmra.mxu0 %v965
    %v1003 = vpop.f32.mrf.mxu0
    %v1004 = vadd.f32 %v961, %v1003
    %v1005 = vpop.f32.mrf.mxu0
    %1006 = vdwg.mxu0
    %1007 = vmatpush.bf16.xpose.msra.mxu0 %v992
    %1008 = vmatpush.bf16.xpose.msra.mxu0 %v989
    %1009 = vmatpush.bf16.xpose.msra.mxu0 %v986
    %1010 = vmatpush.bf16.xpose.msra.mxu0 %v983
    %1011 = vmatpush.bf16.xpose.msra.mxu0 %v980
    %1012 = vmatpush.bf16.xpose.msra.mxu0 %v977
    %1013 = vmatpush.bf16.xpose.msra.mxu0 %v974
    %1014 = vmatpush.bf16.xpose.msra.mxu0 %v971
    %1015 = vmatmul.bf16.gmra.mxu0 %v968
    %v1016 = vpop.f32.mrf.mxu0
    %v1017 = vadd.f32 %v1004, %v1016
    %v1018 = vpop.f32.mrf.mxu0
    %1019 = vdwg.mxu0
    %v1020 = vmax.f32 %v1017, 0.0
    %v1021 = vpack.c.bf16 %v1020, %v1020
    %1022 = vst [vmem:[#allocation5] sm:$0x3] %v1021
    // Predicated region
    $region18: #{tpu_custom_call.1} parent=1 // pred_check
      _
    $region19: #{tpu_custom_call.1} parent=1 // pred_check_branch
      %1024 = sbr.rel (0) target = $region21
    $region20: #{tpu_custom_call.1} parent=1 // pred_region
      %1026 = vsyncadd [#allocation4], 0
      %s1028 = sshll.u32 [#allocation5], 4
      %s1029 = int_to_ptr.vmem [resolvable:$true] %s1028
      %s1030 = sshll.u32 %s3, 4
      %s1031 = int_to_ptr.hbm [resolvable:$true] %s1030
      %1033 = dma.vmem_to_hbm [thread:$0]  %s1029, 32, %s1031, [#allocation4]
    $region21: #{tpu_custom_call.1} parent=1 // pred_fallthru
      _
    // Predicated region
    $region22: #{tpu_custom_call.1} parent=1 // pred_check
      _
    $region23: #{tpu_custom_call.1} parent=1 // pred_check_branch
      %1035 = sbr.rel (0) target = $region25
    $region24: #{tpu_custom_call.1} parent=1 // pred_region
      %1037 = dma.done [#allocation4], 32
    $region25: #{tpu_custom_call.1} parent=1 // pred_fallthru
      _
    %1038 = vsyncpa [#allocation3], 1
    %1039 = vsyncpa [#allocation4], 1

</llo_original>
